<compile_context>
chip_gen: v7x
topology: tpu7x:2x2x1
jax: 0.10.0
libtpu: 0.0.40
codegen_flags: <defaults>
</compile_context>

<pallas_src>
import jax
import jax.numpy as jnp
from jax.experimental import pallas as pl
from jax.experimental.pallas import tpu as pltpu


C_IN = 3
C_OUT = 6
TILE_P_MAX = 32768  # pixels per grid step; ~72 B/pixel of double-buffered
                    # VMEM -> ~2.4 MB/step, safely under all VMEM limits.


def _fused_kernel(x_ref, w1_ref, b1_ref, w2_ref, b2_ref, o_ref):
    """x_ref : (C_IN, TILE_P)  zero-padded input pixels of one sample.
    w1_ref: (C_OUT, C_IN) 1x1 conv weight.         b1_ref: (C_OUT, 1) bias.
    w2_ref: (C_OUT, C_IN) folded conv∘conv weight. b2_ref: (C_OUT, 1) bias.
    o_ref : (C_OUT, TILE_P) output pixels."""
    x = x_ref[...]                       # (3, TP)
    w1 = w1_ref[...]                     # (6, 3)
    w2 = w2_ref[...]                     # (6, 3)

    x0 = x[0:1, :]                       # (1, TP)
    x1 = x[1:2, :]
    x2 = x[2:3, :]

    # 1x1 conv == per-pixel channel map; K=3, so plain VPU FMAs beat the MXU.
    v3 = (w1[:, 0:1] * x0 + w1[:, 1:2] * x1 + w1[:, 2:3] * x2) + b1_ref[...]
    v6 = (w2[:, 0:1] * x0 + w2[:, 1:2] * x1 + w2[:, 2:3] * x2) + b2_ref[...]

    # v1 = 3 + v3 ; v2 = clamp(v1, 0, 6) ; v5 = v2 * v6 ; v4 = v5 / 6
    v2 = jnp.clip(v3 + 3.0, 0.0, 6.0)
    o_ref[...] = (v2 * v6) * (1.0 / 6.0)


def model_forward(x_nchw, weight, bias):
    """x_nchw: (N, 3, H, W) float32.  weight: (6, 3) 1x1 conv kernel.
    bias: (6,).  Returns (N, 6, H+2, W+2) float32 (conv padding=1)."""
    n, c, h, w = x_nchw.shape
    assert c == C_IN
    hp, wp = h + 2, w + 2
    p = hp * wp

    w1 = weight.astype(jnp.float32)                                   # (6, 3)
    b1 = bias.astype(jnp.float32)                                     # (6,)
    # Fold conv(conv(x)) into a second independent channel map of x
    # (exact f32 elementwise math, no matmul-precision ambiguity):
    #   W2[o,i] = sum_c W[o,c]*W[c,i]   ;   b2[o] = sum_c W[o,c]*b[c] + b[o]
    w2 = jnp.sum(w1[:, :, None] * w1[None, :C_IN, :], axis=1)         # (6, 3)
    b2 = jnp.sum(w1[:, :C_IN] * b1[None, :C_IN], axis=1) + b1         # (6,)

    # conv2d padding=1 -> zero-pad spatially, then a FREE reshape to (N, C, P)
    # (no HBM transposes anywhere).
    x_pad = jnp.pad(x_nchw.astype(jnp.float32),
                    ((0, 0), (0, 0), (1, 1), (1, 1)))
    x_flat = x_pad.reshape(n, C_IN, p)

    # Pixel-axis tiling: as large as possible (amortizes per-step overhead),
    # multiple of 128 (lane-dense, unmasked stores), capped at TILE_P_MAX.
    p128 = pl.cdiv(p, 128) * 128
    num_tiles = pl.cdiv(p128, TILE_P_MAX)
    tile_p = pl.cdiv(pl.cdiv(p128, num_tiles), 128) * 128
    p_pad = tile_p * num_tiles
    if p_pad != p:
        x_flat = jnp.pad(x_flat, ((0, 0), (0, 0), (0, p_pad - p)))

    out = pl.pallas_call(
        _fused_kernel,
        out_shape=jax.ShapeDtypeStruct((n, C_OUT, p_pad), jnp.float32),
        grid_spec=pltpu.PrefetchScalarGridSpec(
            num_scalar_prefetch=0,
            grid=(n, num_tiles),
            in_specs=[
                pl.BlockSpec((None, C_IN, tile_p), lambda b, i: (b, 0, i)),
                pl.BlockSpec((C_OUT, C_IN), lambda b, i: (0, 0)),
                pl.BlockSpec((C_OUT, 1), lambda b, i: (0, 0)),
                pl.BlockSpec((C_OUT, C_IN), lambda b, i: (0, 0)),
                pl.BlockSpec((C_OUT, 1), lambda b, i: (0, 0)),
            ],
            out_specs=pl.BlockSpec((None, C_OUT, tile_p),
                                   lambda b, i: (b, 0, i)),
        ),
        compiler_params=pltpu.CompilerParams(
            dimension_semantics=("parallel", "parallel")),
    )(x_flat, w1, b1.reshape(C_OUT, 1), w2, b2.reshape(C_OUT, 1))

    # Drop pixel-axis padding (if any); reshape back to NCHW is free.
    if p_pad != p:
        out = out[:, :, :p]
    return out.reshape(n, C_OUT, hp, wp)


def _reference(x_nchw, weight, bias):
    """Plain-JAX reference of the same (adjusted) semantics, for checking."""
    hi = jax.lax.Precision.HIGHEST
    x_pad = jnp.pad(x_nchw, ((0, 0), (0, 0), (1, 1), (1, 1)))
    v3 = (jnp.einsum("oc,nchw->nohw", weight, x_pad, precision=hi)
          + bias[None, :, None, None])
    v6 = (jnp.einsum("oc,nchw->nohw", weight, v3[:, :C_IN], precision=hi)
          + bias[None, :, None, None])
    v2 = jnp.clip(3.0 + v3, 0.0, 6.0)
    return v2 * v6 / 6.0


if __name__ == "__main__":
    key = jax.random.PRNGKey(0)
    kx, kw, kb = jax.random.split(key, 3)

    # Deterministic parameters (Conv2d(3, 6, 1) shapes; kaiming-uniform-like).
    bound = 1.0 / jnp.sqrt(jnp.float32(C_IN))
    weight = jax.random.uniform(kw, (C_OUT, C_IN), jnp.float32, -bound, bound)
    bias = jax.random.uniform(kb, (C_OUT,), jnp.float32, -bound, bound)

    # Small input consistent with the module: NCHW, 3 input channels.
    x = jax.random.normal(kx, (2, 3, 16, 16), jnp.float32)

    fwd = jax.jit(model_forward)
    out = jax.block_until_ready(fwd(x, weight, bias))
    ref = _reference(x, weight, bias)

    assert out.shape == (2, 6, 18, 18)
    assert jnp.allclose(out, ref, atol=2e-5, rtol=2e-5)
    print("KERNEL_OK")
</pallas_src>

<mosaic_0001>
module attributes {stable_mosaic.version = 11 : i64} {
  func.func @_fused_kernel(%arg0: i32, %arg1: i32, %arg2: memref<1x3x384xf32, #tpu.memory_space<vmem>>, %arg3: memref<6x3xf32, #tpu.memory_space<vmem>>, %arg4: memref<6x1xf32, #tpu.memory_space<vmem>>, %arg5: memref<6x3xf32, #tpu.memory_space<vmem>>, %arg6: memref<6x1xf32, #tpu.memory_space<vmem>>, %arg7: memref<1x6x384xf32, #tpu.memory_space<vmem>>) attributes {dimension_semantics = [#tpu.dimension_semantics<parallel>, #tpu.dimension_semantics<parallel>], iteration_bounds = array<i64: 2, 1>, scalar_prefetch = 0 : i64, scratch_operands = 0 : i64, tpu.core_type = #tpu.core_type<tc>, window_params = [{transform_indices = @transform_0, window_bounds = array<i64: 1, 3, 384>}, {pipeline_mode = #tpu.pipeline_mode<synchronous>, transform_indices = @transform_1, window_bounds = array<i64: 6, 3>}, {pipeline_mode = #tpu.pipeline_mode<synchronous>, transform_indices = @transform_2, window_bounds = array<i64: 6, 1>}, {pipeline_mode = #tpu.pipeline_mode<synchronous>, transform_indices = @transform_3, window_bounds = array<i64: 6, 3>}, {pipeline_mode = #tpu.pipeline_mode<synchronous>, transform_indices = @transform_4, window_bounds = array<i64: 6, 1>}, {transform_indices = @transform_5, window_bounds = array<i64: 1, 6, 384>}]} {
    %c0 = arith.constant 0 : index
    %c0_0 = arith.constant 0 : index
    %c0_1 = arith.constant 0 : index
    %0 = vector.load %arg2[%c0, %c0_0, %c0_1] : memref<1x3x384xf32, #tpu.memory_space<vmem>>, vector<1x3x384xf32>
    %1 = vector.shape_cast %0 : vector<1x3x384xf32> to vector<3x384xf32>
    %c0_2 = arith.constant 0 : index
    %c0_3 = arith.constant 0 : index
    %2 = vector.load %arg3[%c0_2, %c0_3] : memref<6x3xf32, #tpu.memory_space<vmem>>, vector<6x3xf32>
    %c0_4 = arith.constant 0 : index
    %c0_5 = arith.constant 0 : index
    %3 = vector.load %arg5[%c0_4, %c0_5] : memref<6x3xf32, #tpu.memory_space<vmem>>, vector<6x3xf32>
    %4 = vector.extract_strided_slice %1 {offsets = [0, 0], sizes = [1, 384], strides = [1, 1]} : vector<3x384xf32> to vector<1x384xf32>
    %5 = vector.extract_strided_slice %1 {offsets = [1, 0], sizes = [1, 384], strides = [1, 1]} : vector<3x384xf32> to vector<1x384xf32>
    %6 = vector.extract_strided_slice %1 {offsets = [2, 0], sizes = [1, 384], strides = [1, 1]} : vector<3x384xf32> to vector<1x384xf32>
    %7 = vector.extract_strided_slice %2 {offsets = [0, 0], sizes = [6, 1], strides = [1, 1]} : vector<6x3xf32> to vector<6x1xf32>
    %8 = vector.broadcast %7 : vector<6x1xf32> to vector<6x384xf32>
    %9 = vector.broadcast %4 : vector<1x384xf32> to vector<6x384xf32>
    %10 = arith.mulf %8, %9 : vector<6x384xf32>
    %11 = vector.extract_strided_slice %2 {offsets = [0, 1], sizes = [6, 1], strides = [1, 1]} : vector<6x3xf32> to vector<6x1xf32>
    %12 = vector.broadcast %11 : vector<6x1xf32> to vector<6x384xf32>
    %13 = vector.broadcast %5 : vector<1x384xf32> to vector<6x384xf32>
    %14 = arith.mulf %12, %13 : vector<6x384xf32>
    %15 = arith.addf %10, %14 : vector<6x384xf32>
    %16 = vector.extract_strided_slice %2 {offsets = [0, 2], sizes = [6, 1], strides = [1, 1]} : vector<6x3xf32> to vector<6x1xf32>
    %17 = vector.broadcast %16 : vector<6x1xf32> to vector<6x384xf32>
    %18 = vector.broadcast %6 : vector<1x384xf32> to vector<6x384xf32>
    %19 = arith.mulf %17, %18 : vector<6x384xf32>
    %20 = arith.addf %15, %19 : vector<6x384xf32>
    %c0_6 = arith.constant 0 : index
    %c0_7 = arith.constant 0 : index
    %21 = vector.load %arg4[%c0_6, %c0_7] : memref<6x1xf32, #tpu.memory_space<vmem>>, vector<6x1xf32>
    %22 = vector.broadcast %21 : vector<6x1xf32> to vector<6x384xf32>
    %23 = arith.addf %20, %22 : vector<6x384xf32>
    %24 = vector.extract_strided_slice %3 {offsets = [0, 0], sizes = [6, 1], strides = [1, 1]} : vector<6x3xf32> to vector<6x1xf32>
    %25 = vector.broadcast %24 : vector<6x1xf32> to vector<6x384xf32>
    %26 = vector.broadcast %4 : vector<1x384xf32> to vector<6x384xf32>
    %27 = arith.mulf %25, %26 : vector<6x384xf32>
    %28 = vector.extract_strided_slice %3 {offsets = [0, 1], sizes = [6, 1], strides = [1, 1]} : vector<6x3xf32> to vector<6x1xf32>
    %29 = vector.broadcast %28 : vector<6x1xf32> to vector<6x384xf32>
    %30 = vector.broadcast %5 : vector<1x384xf32> to vector<6x384xf32>
    %31 = arith.mulf %29, %30 : vector<6x384xf32>
    %32 = arith.addf %27, %31 : vector<6x384xf32>
    %33 = vector.extract_strided_slice %3 {offsets = [0, 2], sizes = [6, 1], strides = [1, 1]} : vector<6x3xf32> to vector<6x1xf32>
    %34 = vector.broadcast %33 : vector<6x1xf32> to vector<6x384xf32>
    %35 = vector.broadcast %6 : vector<1x384xf32> to vector<6x384xf32>
    %36 = arith.mulf %34, %35 : vector<6x384xf32>
    %37 = arith.addf %32, %36 : vector<6x384xf32>
    %c0_8 = arith.constant 0 : index
    %c0_9 = arith.constant 0 : index
    %38 = vector.load %arg6[%c0_8, %c0_9] : memref<6x1xf32, #tpu.memory_space<vmem>>, vector<6x1xf32>
    %39 = vector.broadcast %38 : vector<6x1xf32> to vector<6x384xf32>
    %40 = arith.addf %37, %39 : vector<6x384xf32>
    %cst = arith.constant 3.000000e+00 : f32
    %41 = vector.broadcast %cst : f32 to vector<6x384xf32>
    %42 = arith.addf %23, %41 : vector<6x384xf32>
    %cst_10 = arith.constant 0.000000e+00 : f32
    %cst_11 = arith.constant 6.000000e+00 : f32
    %43 = vector.broadcast %cst_10 : f32 to vector<6x384xf32>
    %44 = arith.maximumf %43, %42 : vector<6x384xf32>
    %45 = vector.broadcast %cst_11 : f32 to vector<6x384xf32>
    %46 = arith.minimumf %45, %44 : vector<6x384xf32>
    %47 = arith.mulf %46, %40 : vector<6x384xf32>
    %cst_12 = arith.constant 0.166666672 : f32
    %48 = vector.broadcast %cst_12 : f32 to vector<6x384xf32>
    %49 = arith.mulf %47, %48 : vector<6x384xf32>
    %c0_13 = arith.constant 0 : index
    %c0_14 = arith.constant 0 : index
    %c0_15 = arith.constant 0 : index
    %50 = vector.load %arg7[%c0_13, %c0_14, %c0_15] : memref<1x6x384xf32, #tpu.memory_space<vmem>>, vector<1x6x384xf32>
    %51 = vector.shape_cast %50 : vector<1x6x384xf32> to vector<6x384xf32>
    %52 = vector.shape_cast %49 : vector<6x384xf32> to vector<1x6x384xf32>
    tpu.vector_store %arg7[%c0_13, %c0_14, %c0_15], %52 {strides = array<i32>} : memref<1x6x384xf32, #tpu.memory_space<vmem>>, vector<1x6x384xf32>,
    return
  }
  func.func @transform_0(%arg0: i32, %arg1: i32) -> (i32, i32, i32) {
    %c0_i32 = arith.constant 0 : i32
    %c0_i32_0 = arith.constant 0 : i32
    return %arg0, %c0_i32, %arg1 : i32, i32, i32
  }
  func.func @transform_1(%arg0: i32, %arg1: i32) -> (i32, i32) {
    %c0_i32 = arith.constant 0 : i32
    %c0_i32_0 = arith.constant 0 : i32
    %c0_i32_1 = arith.constant 0 : i32
    return %c0_i32, %c0_i32_0 : i32, i32
  }
  func.func @transform_2(%arg0: i32, %arg1: i32) -> (i32, i32) {
    %c0_i32 = arith.constant 0 : i32
    %c0_i32_0 = arith.constant 0 : i32
    %c0_i32_1 = arith.constant 0 : i32
    return %c0_i32, %c0_i32_0 : i32, i32
  }
  func.func @transform_3(%arg0: i32, %arg1: i32) -> (i32, i32) {
    %c0_i32 = arith.constant 0 : i32
    %c0_i32_0 = arith.constant 0 : i32
    %c0_i32_1 = arith.constant 0 : i32
    return %c0_i32, %c0_i32_0 : i32, i32
  }
  func.func @transform_4(%arg0: i32, %arg1: i32) -> (i32, i32) {
    %c0_i32 = arith.constant 0 : i32
    %c0_i32_0 = arith.constant 0 : i32
    %c0_i32_1 = arith.constant 0 : i32
    return %c0_i32, %c0_i32_0 : i32, i32
  }
  func.func @transform_5(%arg0: i32, %arg1: i32) -> (i32, i32, i32) {
    %c0_i32 = arith.constant 0 : i32
    %c0_i32_0 = arith.constant 0 : i32
    return %arg0, %c0_i32, %arg1 : i32, i32, i32
  }
}

</mosaic_0001>

<llo_original>
// kernel: model_forward.1
$region0: #{model_forward.1}
  #allocation0 [shape = 'u32[]', space=smem, size = 0x4, offset = 0x4, fixed_abs, tag = 'smem constant byte address 0x4 - core index']
  #allocation1 [shape = 'u32[144,128]{1,0:T(1,128)}', space=vmem, size = 0x12000, scoped, tag = 'internal scratch']
  %s0 = inlined_call_operand.vmem [shape: f32[2,3,384], index: 0, kind: input, shape index: {}]
  %s1 = inlined_call_operand.vmem [shape: f32[6,3], index: 1, kind: input, shape index: {}]
  %s2 = inlined_call_operand.vmem [shape: f32[6,1], index: 2, kind: input, shape index: {}]
  %s3 = inlined_call_operand.vmem [shape: f32[6,3], index: 3, kind: input, shape index: {}]
  %s4 = inlined_call_operand.vmem [shape: f32[6,1], index: 4, kind: input, shape index: {}]
  %s5 = inlined_call_operand.vmem [shape: f32[2,6,384], index: 5, kind: output, shape index: {}]
  %s6 = sld [smem:[#allocation0]]
  $region53: #{model_forward.1} parent=0
    _
  %s8 = ssub.s32 1, %s6
  %s9 = scalar_select 0, %s8, %s6
  loop: start=0, step=1, limit=4
  $region2: #{model_forward.1} parent=0 // loop_pre_header
    _
  $region3: #{model_forward.1} parent=0 // loop_header
    %s11 = sphi 0, %s15
    %p12 = scmp.ge.s32.totalorder %s11, 4
    %s18 = sphi 0, %s30
    %s19 = sphi 0, %s26
    %s20 = sphi 0, %s18
    %s21 = sphi 0, %s19
    %s22 = sphi 0, %s20
    %s23 = sphi 0, %s21
    %s35 = sphi 0, %s37
    %s38 = sphi 0, %s35
    %s39 = sphi 0, %s38
    %s55 = sphi 0, %s39
    %s59 = sphi 0, %s59
    %s61 = sphi 0, %s59
    %s62 = sphi 0, %s61
    %s76 = sphi 0, %s62
    %s80 = sphi 0, %s80
    %s82 = sphi 0, %s80
    %s83 = sphi 0, %s82
    %s97 = sphi 0, %s83
    %s101 = sphi 0, %s101
    %s103 = sphi 0, %s101
    %s104 = sphi 0, %s103
    %s118 = sphi 0, %s104
    %s122 = sphi 0, %s122
    %s124 = sphi 0, %s122
    %s125 = sphi 0, %s124
    %s139 = sphi 0, %s125
    %s147 = sphi 0, %s149
    %s150 = sphi 0, %s147
    %s151 = sphi 0, %s150
    %s167 = sphi 0, %s151
  $region4: #{model_forward.1} parent=0 // loop_header_branch
    %14 = sbr.rel (%p12) target = $region8
  $region5: #{model_forward.1} parent=0 // loop_body
    %s16 = ssub.s32 %s11, 1
    %s17 = ssub.s32 %s11, 2
    %s24 = sadd.s32 1, %s19
    %p25 = scmp.ge.s32.totalorder %s24, 1
    %s26 = scalar_select %p25, 0, %s24
    %s27 = sadd.s32 1, %s18
    %s28 = scalar_select %p25, %s27, %s18
    %p29 = scmp.ge.s32.totalorder %s28, 2
    %s30 = scalar_select %p29, 0, %s28
    %s31 = ssub.s32 %s18, %s30
    %s32 = ssub.s32 %s19, %s26
    %s33 = sor.u32 %s31, %s32
    %p34 = scmp.eq.s32.totalorder %s33, 0
    %s36 = sadd.s32 %s35, 1
    %s37 = scalar_select %p34, %s35, %s36
    %p40 = pneg %p34
    %p41 = scmp.eq.s32.totalorder %s11, 1
    %p42 = por %p40, %p41
    %p43 = scmp.ne.s32.totalorder %s35, %s38
    %p44 = scmp.eq.s32.totalorder %s11, 0
    %p45 = por %p43, %p44
    %p46 = scmp.ne.s32.totalorder %s35, %s38
    %p47 = scmp.eq.s32.totalorder %s16, 1
    %p48 = por %p46, %p47
    %p49 = scmp.ne.s32.totalorder %s38, %s39
    %p50 = scmp.eq.s32.totalorder %s16, 0
    %p51 = por %p49, %p50
    %p52 = scmp.ne.s32.totalorder %s38, %s39
    %p53 = scmp.eq.s32.totalorder %s17, 1
    %p54 = por %p52, %p53
    %p56 = scmp.ne.s32.totalorder %s39, %s55
    %p57 = scmp.eq.s32.totalorder %s17, 0
    %p58 = por %p56, %p57
    %s60 = sadd.s32 %s59, 1
    %p63 = scmp.eq.s32.totalorder %s11, 1
    %p64 = scmp.ne.s32.totalorder %s59, %s61
    %p65 = scmp.eq.s32.totalorder %s11, 0
    %p66 = por %p64, %p65
    %p67 = scmp.ne.s32.totalorder %s59, %s61
    %p68 = scmp.eq.s32.totalorder %s16, 1
    %p69 = por %p67, %p68
    %p70 = scmp.ne.s32.totalorder %s61, %s62
    %p71 = scmp.eq.s32.totalorder %s16, 0
    %p72 = por %p70, %p71
    %p73 = scmp.ne.s32.totalorder %s61, %s62
    %p74 = scmp.eq.s32.totalorder %s17, 1
    %p75 = por %p73, %p74
    %p77 = scmp.ne.s32.totalorder %s62, %s76
    %p78 = scmp.eq.s32.totalorder %s17, 0
    %p79 = por %p77, %p78
    %s81 = sadd.s32 %s80, 1
    %p84 = scmp.eq.s32.totalorder %s11, 1
    %p85 = scmp.ne.s32.totalorder %s80, %s82
    %p86 = scmp.eq.s32.totalorder %s11, 0
    %p87 = por %p85, %p86
    %p88 = scmp.ne.s32.totalorder %s80, %s82
    %p89 = scmp.eq.s32.totalorder %s16, 1
    %p90 = por %p88, %p89
    %p91 = scmp.ne.s32.totalorder %s82, %s83
    %p92 = scmp.eq.s32.totalorder %s16, 0
    %p93 = por %p91, %p92
    %p94 = scmp.ne.s32.totalorder %s82, %s83
    %p95 = scmp.eq.s32.totalorder %s17, 1
    %p96 = por %p94, %p95
    %p98 = scmp.ne.s32.totalorder %s83, %s97
    %p99 = scmp.eq.s32.totalorder %s17, 0
    %p100 = por %p98, %p99
    %s102 = sadd.s32 %s101, 1
    %p105 = scmp.eq.s32.totalorder %s11, 1
    %p106 = scmp.ne.s32.totalorder %s101, %s103
    %p107 = scmp.eq.s32.totalorder %s11, 0
    %p108 = por %p106, %p107
    %p109 = scmp.ne.s32.totalorder %s101, %s103
    %p110 = scmp.eq.s32.totalorder %s16, 1
    %p111 = por %p109, %p110
    %p112 = scmp.ne.s32.totalorder %s103, %s104
    %p113 = scmp.eq.s32.totalorder %s16, 0
    %p114 = por %p112, %p113
    %p115 = scmp.ne.s32.totalorder %s103, %s104
    %p116 = scmp.eq.s32.totalorder %s17, 1
    %p117 = por %p115, %p116
    %p119 = scmp.ne.s32.totalorder %s104, %s118
    %p120 = scmp.eq.s32.totalorder %s17, 0
    %p121 = por %p119, %p120
    %s123 = sadd.s32 %s122, 1
    %p126 = scmp.eq.s32.totalorder %s11, 1
    %p127 = scmp.ne.s32.totalorder %s122, %s124
    %p128 = scmp.eq.s32.totalorder %s11, 0
    %p129 = por %p127, %p128
    %p130 = scmp.ne.s32.totalorder %s122, %s124
    %p131 = scmp.eq.s32.totalorder %s16, 1
    %p132 = por %p130, %p131
    %p133 = scmp.ne.s32.totalorder %s124, %s125
    %p134 = scmp.eq.s32.totalorder %s16, 0
    %p135 = por %p133, %p134
    %p136 = scmp.ne.s32.totalorder %s124, %s125
    %p137 = scmp.eq.s32.totalorder %s17, 1
    %p138 = por %p136, %p137
    %p140 = scmp.ne.s32.totalorder %s125, %s139
    %p141 = scmp.eq.s32.totalorder %s17, 0
    %p142 = por %p140, %p141
    %s143 = ssub.s32 %s18, %s30
    %s144 = ssub.s32 %s19, %s26
    %s145 = sor.u32 %s143, %s144
    %p146 = scmp.eq.s32.totalorder %s145, 0
    %s148 = sadd.s32 %s147, 1
    %s149 = scalar_select %p146, %s147, %s148
    %p152 = pneg %p146
    %p153 = scmp.eq.s32.totalorder %s11, 1
    %p154 = por %p152, %p153
    %p155 = scmp.ne.s32.totalorder %s147, %s150
    %p156 = scmp.eq.s32.totalorder %s11, 0
    %p157 = por %p155, %p156
    %p158 = scmp.ne.s32.totalorder %s147, %s150
    %p159 = scmp.eq.s32.totalorder %s16, 1
    %p160 = por %p158, %p159
    %p161 = scmp.ne.s32.totalorder %s150, %s151
    %p162 = scmp.eq.s32.totalorder %s16, 0
    %p163 = por %p161, %p162
    %p164 = scmp.ne.s32.totalorder %s150, %s151
    %p165 = scmp.eq.s32.totalorder %s17, 1
    %p166 = por %p164, %p165
    %p168 = scmp.ne.s32.totalorder %s151, %s167
    %p169 = scmp.eq.s32.totalorder %s17, 0
    %p170 = por %p168, %p169
    %p171 = scmp.le.s32.totalorder 1, %s11
    %p172 = scmp.lt.s32.totalorder %s11, 3
    %p173 = pnand %p171, %p172
    %p174 = pneg %p173
    // Predicated region
    $region9: #{model_forward.1} parent=5 // pred_check
      _
    $region10: #{model_forward.1} parent=5 // pred_check_branch
      %176 = sbr.rel (%p173) target = $region12
    $region11: #{model_forward.1} parent=5 // pred_region
      %s177 = ssub.s32 %s11, 1
      // Predicated region
      $region13: #{model_forward.1} parent=11 // pred_check
        %p178 = pneg %p72
      $region14: #{model_forward.1} parent=11 // pred_check_branch
        %180 = sbr.rel (%p178) target = $region16
      $region15: #{model_forward.1} parent=11 // pred_region
        _
      $region16: #{model_forward.1} parent=11 // pred_fallthru
        _
      // Predicated region
      $region17: #{model_forward.1} parent=11 // pred_check
        %p181 = pneg %p93
      $region18: #{model_forward.1} parent=11 // pred_check_branch
        %183 = sbr.rel (%p181) target = $region20
      $region19: #{model_forward.1} parent=11 // pred_region
        _
      $region20: #{model_forward.1} parent=11 // pred_fallthru
        _
      // Predicated region
      $region21: #{model_forward.1} parent=11 // pred_check
        %p184 = pneg %p114
      $region22: #{model_forward.1} parent=11 // pred_check_branch
        %186 = sbr.rel (%p184) target = $region24
      $region23: #{model_forward.1} parent=11 // pred_region
        _
      $region24: #{model_forward.1} parent=11 // pred_fallthru
        _
      // Predicated region
      $region25: #{model_forward.1} parent=11 // pred_check
        %p187 = pneg %p135
      $region26: #{model_forward.1} parent=11 // pred_check_branch
        %189 = sbr.rel (%p187) target = $region28
      $region27: #{model_forward.1} parent=11 // pred_region
        _
      $region28: #{model_forward.1} parent=11 // pred_fallthru
        _
    $region12: #{model_forward.1} parent=5 // pred_fallthru
      _
    %p190 = scmp.lt.s32.totalorder %s11, 2
    // Predicated region
    $region29: #{model_forward.1} parent=5 // pred_check
      %p191 = pneg %p190
    $region30: #{model_forward.1} parent=5 // pred_check_branch
      %193 = sbr.rel (%p191) target = $region32
    $region31: #{model_forward.1} parent=5 // pred_region
      // Predicated region
      $region33: #{model_forward.1} parent=31 // pred_check
        %p194 = pneg %p45
      $region34: #{model_forward.1} parent=31 // pred_check_branch
        %196 = sbr.rel (%p194) target = $region36
      $region35: #{model_forward.1} parent=31 // pred_region
        %s197 = smul.u32 3, %s19
        %p198 = scmp.lt.s32.totalorder %s18, 1
        %s199 = scalar_select %p198, %s18, 1
        %p200 = scmp.lt.s32.totalorder %s197, 2
        %s201 = scalar_select %p200, %s197, 2
        %s202 = smul.addr %s199, 3
        %s203 = sadd.s32 %s201, %s202
        %s204 = smul.addr %s203, 4
        %s205 = scalar_lea.vmem %s0, %s204
        %s206 = smul.u32 3, %s19
      $region36: #{model_forward.1} parent=31 // pred_fallthru
        _
    $region32: #{model_forward.1} parent=5 // pred_fallthru
      _
    %p207 = scmp.le.s32.totalorder 1, %s11
    %p208 = scmp.lt.s32.totalorder %s11, 3
    %p209 = pnand %p207, %p208
    %p210 = pneg %p209
    // Predicated region
    $region37: #{model_forward.1} parent=5 // pred_check
      _
    $region38: #{model_forward.1} parent=5 // pred_check_branch
      %212 = sbr.rel (%p209) target = $region40
    $region39: #{model_forward.1} parent=5 // pred_region
      %s213 = ssub.s32 %s11, 1
      %s214 = smul.u32 3, %s21
      %p215 = scmp.lt.s32.totalorder %s20, 1
      %s216 = scalar_select %p215, %s20, 1
      %p217 = scmp.lt.s32.totalorder %s214, 2
      %s218 = scalar_select %p217, %s214, 2
      %s219 = smul.addr %s216, 3
      %s220 = sadd.s32 %s218, %s219
      %s221 = smul.addr %s220, 4
      %s222 = scalar_lea.vmem %s0, %s221
      %p223 = pneg %p51
      %p224 = pneg %p48
      %p225 = pneg %p72
      %p226 = pneg %p69
      %p227 = pneg %p93
      %p228 = pneg %p90
      %p229 = pneg %p114
      %p230 = pneg %p111
      %p231 = pneg %p135
      %p232 = pneg %p132
      %p233 = pneg %p163
      %p234 = pneg %p160
      %s235 = smul.u32 3, %s21
      %p236 = scmp.lt.s32.totalorder %s20, 1
      %s237 = scalar_select %p236, %s20, 1
      %p238 = scmp.lt.s32.totalorder %s235, 2
      %s239 = scalar_select %p238, %s235, 2
      %s240 = smul.addr %s237, 3
      %s241 = sadd.s32 %s239, %s240
      %s242 = smul.addr %s241, 8
      %s243 = scalar_lea.vmem %s5, %s242
      %s244 = smul.u32 3, %s21
      %p245 = scmp.lt.s32.totalorder %s20, 1
      %s246 = scalar_select %p245, %s20, 1
      %p247 = scmp.lt.s32.totalorder %s244, 2
      %s248 = scalar_select %p247, %s244, 2
      %s249 = smul.addr %s246, 3
      %s250 = sadd.s32 %s248, %s249
      %s251 = smul.addr %s250, 4
      %s252 = scalar_lea.vmem %s0, %s251
      %s253 = smul.u32 3, %s21
      %s254 = smul.u32 3, %s21
      %p255 = scmp.lt.s32.totalorder %s20, 1
      %s256 = scalar_select %p255, %s20, 1
      %p257 = scmp.lt.s32.totalorder %s254, 2
      %s258 = scalar_select %p257, %s254, 2
      %s259 = smul.addr %s256, 3
      %s260 = sadd.s32 %s258, %s259
      %s261 = smul.addr %s260, 8
      %s262 = scalar_lea.vmem %s5, %s261
      %s263 = smul.u32 3, %s21
      %v264 = vld [vmem:[%s252] sm:$0x77]
      %v265 = vld [vmem:[%s252 + $0x8] sm:$0x7]
      %v266 = vld [vmem:[%s1] sm:$0x3f]
      %v267 = vld [vmem:[%s3] sm:$0x3f]
      %269 = vset.pattern.permute.xlu0 0
      %270 = vperm.xlu0 %269, %v266
      %v271 = vpop.permute.xlu0 %270
      %v275 = vlaneseq
      %v276 = vshrl.u32 %v275, 7
      %v277 = vsub.s32 0, %v276
      %v278 = vrot.slane %v264, %v277
      %v279 = vlaneseq
      %v280 = vshrl.u32 %v279, 7
      %v281 = vsub.s32 4, %v280
      %v282 = vrot.slane %v264, %v281
      %v283 = vlaneseq
      %v284 = vshrl.u32 %v283, 7
      %v285 = vsub.s32 0, %v284
      %v286 = vrot.slane %v265, %v285
      %v290 = vlaneseq
      %v291 = vshrl.u32 %v290, 7
      %v292 = vsub.s32 0, %v291
      %v293 = vrot.slane %v278, %v292
      %v294 = vlaneseq
      %v295 = vshrl.u32 %v294, 7
      %v296 = vsub.s32 0, %v295
      %v297 = vrot.slane %v282, %v296
      %v298 = vlaneseq
      %v299 = vshrl.u32 %v298, 7
      %v300 = vsub.s32 0, %v299
      %v301 = vrot.slane %v286, %v300
      %v302 = vmul.f32 %v271, %v293
      %v303 = vmul.f32 %v271, %v297
      %v304 = vmul.f32 %v271, %v301
      %305 = vset.pattern.permute.xlu0 1
      %306 = vperm.xlu0 %305, %v266
      %v307 = vpop.permute.xlu0 %306
      %v309 = vlaneseq
      %v310 = vshrl.u32 %v309, 7
      %v311 = vsub.s32 1, %v310
      %v312 = vrot.slane %v264, %v311
      %v313 = vlaneseq
      %v314 = vshrl.u32 %v313, 7
      %v315 = vsub.s32 5, %v314
      %v316 = vrot.slane %v264, %v315
      %v317 = vlaneseq
      %v318 = vshrl.u32 %v317, 7
      %v319 = vsub.s32 1, %v318
      %v320 = vrot.slane %v265, %v319
      %v324 = vlaneseq
      %v325 = vshrl.u32 %v324, 7
      %v326 = vsub.s32 1, %v325
      %v327 = vrot.slane %v312, %v326
      %v328 = vlaneseq
      %v329 = vshrl.u32 %v328, 7
      %v330 = vsub.s32 1, %v329
      %v331 = vrot.slane %v316, %v330
      %v332 = vlaneseq
      %v333 = vshrl.u32 %v332, 7
      %v334 = vsub.s32 1, %v333
      %v335 = vrot.slane %v320, %v334
      %v336 = vmul.f32 %v307, %v327
      %v337 = vmul.f32 %v307, %v331
      %v338 = vmul.f32 %v307, %v335
      %v339 = vadd.f32 %v302, %v336
      %v340 = vadd.f32 %v303, %v337
      %v341 = vadd.f32 %v304, %v338
      %342 = vset.pattern.permute.xlu0 2
      %343 = vperm.xlu0 %342, %v266
      %v344 = vpop.permute.xlu0 %343
      %v346 = vlaneseq
      %v347 = vshrl.u32 %v346, 7
      %v348 = vsub.s32 2, %v347
      %v349 = vrot.slane %v264, %v348
      %v350 = vlaneseq
      %v351 = vshrl.u32 %v350, 7
      %v352 = vsub.s32 6, %v351
      %v353 = vrot.slane %v264, %v352
      %v354 = vlaneseq
      %v355 = vshrl.u32 %v354, 7
      %v356 = vsub.s32 2, %v355
      %v357 = vrot.slane %v265, %v356
      %v361 = vlaneseq
      %v362 = vshrl.u32 %v361, 7
      %v363 = vsub.s32 2, %v362
      %v364 = vrot.slane %v349, %v363
      %v365 = vlaneseq
      %v366 = vshrl.u32 %v365, 7
      %v367 = vsub.s32 2, %v366
      %v368 = vrot.slane %v353, %v367
      %v369 = vlaneseq
      %v370 = vshrl.u32 %v369, 7
      %v371 = vsub.s32 2, %v370
      %v372 = vrot.slane %v357, %v371
      %v373 = vmul.f32 %v344, %v364
      %v374 = vmul.f32 %v344, %v368
      %v375 = vmul.f32 %v344, %v372
      %v376 = vadd.f32 %v339, %v373
      %v377 = vadd.f32 %v340, %v374
      %v378 = vadd.f32 %v341, %v375
      %v379 = vld [vmem:[%s2] sm:$0x3f]
      %381 = vset.pattern.permute.xlu0 0
      %382 = vperm.xlu0 %381, %v379
      %v383 = vpop.permute.xlu0 %382
      %v385 = vadd.f32 %v376, %v383
      %v386 = vadd.f32 %v377, %v383
      %v387 = vadd.f32 %v378, %v383
      %389 = vset.pattern.permute.xlu0 0
      %390 = vperm.xlu0 %389, %v267
      %v391 = vpop.permute.xlu0 %390
      %v393 = vmul.f32 %v391, %v293
      %v394 = vmul.f32 %v391, %v297
      %v395 = vmul.f32 %v391, %v301
      %396 = vset.pattern.permute.xlu0 1
      %397 = vperm.xlu0 %396, %v267
      %v398 = vpop.permute.xlu0 %397
      %v400 = vmul.f32 %v398, %v327
      %v401 = vmul.f32 %v398, %v331
      %v402 = vmul.f32 %v398, %v335
      %v403 = vadd.f32 %v393, %v400
      %v404 = vadd.f32 %v394, %v401
      %v405 = vadd.f32 %v395, %v402
      %406 = vset.pattern.permute.xlu0 2
      %407 = vperm.xlu0 %406, %v267
      %v408 = vpop.permute.xlu0 %407
      %v410 = vmul.f32 %v408, %v364
      %v411 = vmul.f32 %v408, %v368
      %v412 = vmul.f32 %v408, %v372
      %v413 = vadd.f32 %v403, %v410
      %v414 = vadd.f32 %v404, %v411
      %v415 = vadd.f32 %v405, %v412
      %v416 = vld [vmem:[%s4] sm:$0x3f]
      %418 = vset.pattern.permute.xlu0 0
      %419 = vperm.xlu0 %418, %v416
      %v420 = vpop.permute.xlu0 %419
      %v422 = vadd.f32 %v413, %v420
      %v423 = vadd.f32 %v414, %v420
      %v424 = vadd.f32 %v415, %v420
      %v425 = vadd.f32 %v385, 3.0
      %v426 = vadd.f32 %v386, 3.0
      %v427 = vadd.f32 %v387, 3.0
      %v428 = vmax.f32 %v425, 0.0
      %v429 = vmax.f32 %v426, 0.0
      %v430 = vmax.f32 %v427, 0.0
      %v431 = vmin.f32 %v428, 6.0
      %v432 = vmin.f32 %v429, 6.0
      %v433 = vmin.f32 %v430, 6.0
      %v434 = vmul.f32 %v431, %v422
      %v435 = vmul.f32 %v432, %v423
      %v436 = vmul.f32 %v433, %v424
      %v437 = vmul.f32 %v434, 0.16666667
      %v438 = vmul.f32 %v435, 0.16666667
      %v439 = vmul.f32 %v436, 0.16666667
      %440 = vst [vmem:[%s262] sm:$0x3f] %v437
      %441 = vst [vmem:[%s262 + $0x8] sm:$0x3f] %v438
      %442 = vst [vmem:[%s262 + $0x10] sm:$0x3f] %v439
      %s443 = smul.u32 3, %s21
      %p444 = scmp.lt.s32.totalorder %s20, 1
      %s445 = scalar_select %p444, %s20, 1
      %p446 = scmp.lt.s32.totalorder %s443, 2
      %s447 = scalar_select %p446, %s443, 2
      %s448 = smul.addr %s445, 3
      %s449 = sadd.s32 %s447, %s448
      %s450 = smul.addr %s449, 8
      %s451 = scalar_lea.vmem %s5, %s450
      // Predicated region
      $region41: #{model_forward.1} parent=39 // pred_check
        %p452 = pneg %p160
      $region42: #{model_forward.1} parent=39 // pred_check_branch
        %454 = sbr.rel (%p452) target = $region44
      $region43: #{model_forward.1} parent=39 // pred_region
        %s455 = smul.u32 3, %s21
      $region44: #{model_forward.1} parent=39 // pred_fallthru
        _
    $region40: #{model_forward.1} parent=5 // pred_fallthru
      _
    %p456 = scmp.le.s32.totalorder 2, %s11
    // Predicated region
    $region45: #{model_forward.1} parent=5 // pred_check
      %p457 = pneg %p456
    $region46: #{model_forward.1} parent=5 // pred_check_branch
      %459 = sbr.rel (%p457) target = $region48
    $region47: #{model_forward.1} parent=5 // pred_region
      %s460 = ssub.s32 %s11, 2
      // Predicated region
      $region49: #{model_forward.1} parent=47 // pred_check
        %p461 = pneg %p166
      $region50: #{model_forward.1} parent=47 // pred_check_branch
        %463 = sbr.rel (%p461) target = $region52
      $region51: #{model_forward.1} parent=47 // pred_region
        %s464 = smul.u32 3, %s23
        %p465 = scmp.lt.s32.totalorder %s22, 1
        %s466 = scalar_select %p465, %s22, 1
        %p467 = scmp.lt.s32.totalorder %s464, 2
        %s468 = scalar_select %p467, %s464, 2
        %s469 = smul.addr %s466, 3
        %s470 = sadd.s32 %s468, %s469
        %s471 = smul.addr %s470, 8
        %s472 = scalar_lea.vmem %s5, %s471
      $region52: #{model_forward.1} parent=47 // pred_fallthru
        _
    $region48: #{model_forward.1} parent=5 // pred_fallthru
      _
  $region6: #{model_forward.1} parent=0 // loop_footer
    %s15 = sadd.s32 1, %s11
  $region7: #{model_forward.1} parent=0 // loop_footer_branch
    %10 = sbr.rel target = $region3
  $region8: #{model_forward.1} parent=0 // loop_exit
    _

</llo_original>
